<compile_context>
chip_gen: v5e
topology: v5e:2x2
jax: 0.10.0
libtpu: 0.0.40
codegen_flags: <defaults>
</compile_context>

<pallas_src>
import functools
import math

import jax
import jax.numpy as jnp
from jax.experimental import pallas as pl
from jax.experimental.pallas import tpu as pltpu

VMEM_SPEC = pl.BlockSpec(memory_space=pltpu.MemorySpace.VMEM)


def _r8(x):
    return -(-x // 8) * 8


def _r128(x):
    return -(-x // 128) * 128


# ---------------------------------------------------------------------------
# Slab layout: one (rows, cols) f32 buffer, every item row-offset-aligned to 8
# ---------------------------------------------------------------------------
def compute_layout(L, ld, hd, thd, out_dim):
    out_pad = max(128, _r128(out_dim))
    lay = {}
    row = 0
    lay["wg_off"] = row                      # block-diagonal G weights (L*ld, L*hd)
    row += _r8(L * ld)
    lay["bias_off"] = row                    # all biases, one row each
    lay["bias_rows"] = _r8(3 + 2 * (L - 1))  # bg, tb1[i], tb2[i], fb1, fb2
    row += lay["bias_rows"]
    lay["tw1_off"] = row                     # T linear-1 weights (hd, thd) each
    lay["tw1_stride"] = _r8(hd)
    row += (L - 1) * lay["tw1_stride"]
    lay["tw2_off"] = row                     # T linear-2 weights (thd, hd) each
    lay["tw2_stride"] = _r8(thd)
    row += (L - 1) * lay["tw2_stride"]
    lay["fw1_off"] = row                     # final linear-1 (hd, thd)
    row += _r8(hd)
    lay["fw2_off"] = row                     # final linear-2, out cols zero-padded
    row += _r8(thd)
    lay["rows"] = _r8(row)
    lay["cols"] = max(128, _r128(max(L * hd, hd, thd, out_pad)))
    lay["out_pad"] = out_pad
    return lay


def pack_params(params, L, ld, hd, thd, out_dim, lay):
    gw, gb, tw1, tb1, tw2, tb2, fw1, fb1, fw2, fb2 = params
    slab = jnp.zeros((lay["rows"], lay["cols"]), jnp.float32)
    bo = lay["bias_off"]
    # Block-diagonal G weights + concatenated G bias row.
    for i in range(L):
        slab = slab.at[lay["wg_off"] + i * ld:lay["wg_off"] + (i + 1) * ld,
                       i * hd:(i + 1) * hd].set(gw[i])
        slab = slab.at[bo, i * hd:(i + 1) * hd].set(gb[i])
    # T blocks.
    for i in range(L - 1):
        r1 = lay["tw1_off"] + i * lay["tw1_stride"]
        slab = slab.at[r1:r1 + hd, 0:thd].set(tw1[i])
        slab = slab.at[bo + 1 + i, 0:thd].set(tb1[i])
        r2 = lay["tw2_off"] + i * lay["tw2_stride"]
        slab = slab.at[r2:r2 + thd, 0:hd].set(tw2[i])
        slab = slab.at[bo + 1 + (L - 1) + i, 0:hd].set(tb2[i])
    # Final head (out columns zero-padded to lane-dense width).
    slab = slab.at[lay["fw1_off"]:lay["fw1_off"] + hd, 0:thd].set(fw1)
    slab = slab.at[bo + 1 + 2 * (L - 1), 0:thd].set(fb1)
    slab = slab.at[lay["fw2_off"]:lay["fw2_off"] + thd, 0:out_dim].set(fw2)
    slab = slab.at[bo + 2 + 2 * (L - 1), 0:out_dim].set(fb2)
    return slab


# ---------------------------------------------------------------------------
# Fused Pallas kernel: the whole GenerativeStacked.forward in one gridless call
# ---------------------------------------------------------------------------
def _fused_forward_kernel(z_ref, p_ref, o_ref, *, L, ld, hd, thd, lay):
    f32, bf16 = jnp.float32, jnp.bfloat16

    # One (bias_rows, 128) tile read for ALL biases; rows sliced from vregs.
    bias = p_ref[lay["bias_off"]:lay["bias_off"] + lay["bias_rows"], :]
    TB1, TB2 = 1, 1 + (L - 1)
    FB1, FB2 = 1 + 2 * (L - 1), 2 + 2 * (L - 1)

    # Fused G path: single block-diagonal matmul for all L G layers (off the
    # serial chain). bf16 operands, f32 accumulation.
    wg = p_ref[lay["wg_off"]:lay["wg_off"] + L * ld, 0:L * hd]
    g_all = jnp.dot(z_ref[...].astype(bf16), wg.astype(bf16),
                    preferred_element_type=f32) + bias[0:1, 0:L * hd]

    # Serial chain h = T(h) + g_{i+1}; g slices taken just-in-time.
    h = g_all[:, 0:hd]
    for i in range(L - 1):
        r1 = lay["tw1_off"] + i * lay["tw1_stride"]
        w1 = p_ref[r1:r1 + hd, 0:thd]
        t1 = jnp.maximum(
            jnp.dot(h.astype(bf16), w1.astype(bf16), preferred_element_type=f32)
            + bias[TB1 + i:TB1 + i + 1, 0:thd], 0.0)
        r2 = lay["tw2_off"] + i * lay["tw2_stride"]
        w2 = p_ref[r2:r2 + thd, 0:hd]
        t2 = jnp.maximum(
            jnp.dot(t1.astype(bf16), w2.astype(bf16), preferred_element_type=f32)
            + bias[TB2 + i:TB2 + i + 1, 0:hd], 0.0)
        h = t2 + g_all[:, (i + 1) * hd:(i + 2) * hd]

    # Final head: sigmoid(relu(h @ W1 + b1) @ W2 + b2), lane-dense (128-wide) store.
    fw1 = p_ref[lay["fw1_off"]:lay["fw1_off"] + hd, 0:thd]
    f1 = jnp.maximum(
        jnp.dot(h.astype(bf16), fw1.astype(bf16), preferred_element_type=f32)
        + bias[FB1:FB1 + 1, 0:thd], 0.0)
    fw2 = p_ref[lay["fw2_off"]:lay["fw2_off"] + thd, 0:lay["out_pad"]]
    logits = (jnp.dot(f1.astype(bf16), fw2.astype(bf16), preferred_element_type=f32)
              + bias[FB2:FB2 + 1, 0:lay["out_pad"]])
    o_ref[...] = jax.nn.sigmoid(logits).astype(o_ref.dtype)


# ---------------------------------------------------------------------------
# Wrapper: one pallas_call for the full forward, under a single jit
# ---------------------------------------------------------------------------
def make_forward(L, ld, hd, thd, out_dim, lay):
    kernel = functools.partial(_fused_forward_kernel,
                               L=L, ld=ld, hd=hd, thd=thd, lay=lay)

    @jax.jit
    def fwd(slab, z_stack):
        batch = z_stack.shape[1]
        # Layout plumbing only: present z as one lane-dense (batch, L*ld) slab.
        z_flat = jnp.transpose(z_stack, (1, 0, 2)).reshape(batch, L * ld)
        flops = 2 * batch * (L * ld * hd + (L - 1) * (hd * thd + thd * hd)
                             + hd * thd + thd * out_dim)
        bytes_accessed = (z_flat.size * 4 + slab.size * 4
                          + batch * lay["out_pad"] * 4)
        out_pad = pl.pallas_call(
            kernel,
            out_shape=jax.ShapeDtypeStruct((batch, lay["out_pad"]), jnp.float32),
            in_specs=[VMEM_SPEC, VMEM_SPEC],
            out_specs=VMEM_SPEC,
            cost_estimate=pl.CostEstimate(flops=flops,
                                          transcendentals=batch * lay["out_pad"],
                                          bytes_accessed=bytes_accessed),
        )(z_flat, slab)
        return out_pad[:, :out_dim]

    return fwd


# ---------------------------------------------------------------------------
# Parameter construction (deterministic, PyTorch nn.Linear-style init)
# ---------------------------------------------------------------------------
def _uniform(key, shape, bound):
    return jax.random.uniform(key, shape, jnp.float32, -bound, bound)


def build_params(key, hidden_dim_list, latent_dim_list, T_hidden_dim_list, output_dim):
    # TODO(synk): slab/block-diagonal packing assumes uniform per-layer dims;
    # heterogeneous dim lists would need padding to the max dim before packing.
    assert len(set(hidden_dim_list)) == 1
    assert len(set(latent_dim_list)) == 1
    assert len(set(T_hidden_dim_list)) == 1
    L = len(hidden_dim_list)
    hd, ld, thd = hidden_dim_list[0], latent_dim_list[0], T_hidden_dim_list[0]
    keys = jax.random.split(key, 10)
    gw = _uniform(keys[0], (L, ld, hd), 1.0 / math.sqrt(ld))
    gb = _uniform(keys[1], (L, hd), 1.0 / math.sqrt(ld))
    tw1 = _uniform(keys[2], (L - 1, hd, thd), 1.0 / math.sqrt(hd))
    tb1 = _uniform(keys[3], (L - 1, thd), 1.0 / math.sqrt(hd))
    tw2 = _uniform(keys[4], (L - 1, thd, hd), 1.0 / math.sqrt(thd))
    tb2 = _uniform(keys[5], (L - 1, hd), 1.0 / math.sqrt(thd))
    fw1 = _uniform(keys[6], (hd, thd), 1.0 / math.sqrt(hd))
    fb1 = _uniform(keys[7], (thd,), 1.0 / math.sqrt(hd))
    fw2 = _uniform(keys[8], (thd, output_dim), 1.0 / math.sqrt(thd))
    fb2 = _uniform(keys[9], (output_dim,), 1.0 / math.sqrt(thd))
    return (gw, gb, tw1, tb1, tw2, tb2, fw1, fb1, fw2, fb2)


# ---------------------------------------------------------------------------
# Pure-JAX f32 reference (mirrors GenerativeStacked.forward) for verification
# ---------------------------------------------------------------------------
def reference_forward(params, z_stack):
    gw, gb, tw1, tb1, tw2, tb2, fw1, fb1, fw2, fb2 = params
    L = gw.shape[0]
    h = z_stack[0] @ gw[0] + gb[0]
    for i in range(L - 1):
        t1 = jnp.maximum(h @ tw1[i] + tb1[i], 0.0)
        t2 = jnp.maximum(t1 @ tw2[i] + tb2[i], 0.0)
        h = t2 + (z_stack[i + 1] @ gw[i + 1] + gb[i + 1])
    f1 = jnp.maximum(h @ fw1 + fb1, 0.0)
    return jax.nn.sigmoid(f1 @ fw2 + fb2)


if __name__ == "__main__":
    # Small, module-consistent shapes.
    batch = 2
    hidden_dim_list = [32, 32, 32]
    latent_dim_list = [8, 8, 8]
    T_hidden_dim_list = [32, 32, 32]
    output_dim = 16

    key = jax.random.PRNGKey(0)
    pkey, zkey = jax.random.split(key)
    params = build_params(pkey, hidden_dim_list, latent_dim_list,
                          T_hidden_dim_list, output_dim)

    L = len(hidden_dim_list)
    hd, ld, thd = hidden_dim_list[0], latent_dim_list[0], T_hidden_dim_list[0]
    lay = compute_layout(L, ld, hd, thd, output_dim)
    slab = pack_params(params, L, ld, hd, thd, output_dim, lay)
    fwd = make_forward(L, ld, hd, thd, output_dim, lay)

    # z_list stacked into a single (L, batch, latent_dim) operand.
    z_stack = jax.random.normal(zkey, (L, batch, ld), jnp.float32)

    out = jax.block_until_ready(fwd(slab, z_stack))
    ref = reference_forward(params, z_stack)

    assert out.shape == (batch, output_dim)
    max_diff = float(jnp.max(jnp.abs(out - ref)))
    # bf16 matmul operands (f32 accumulation) => loosened tolerance vs f32 ref.
    assert jnp.allclose(out, ref, rtol=2e-2, atol=2e-2), f"max abs diff {max_diff}"

    print("KERNEL_OK")
</pallas_src>

<mosaic_0001>
module attributes {stable_mosaic.version = 11 : i64} {
  func.func @_fused_forward_kernel(%arg0: memref<2x24xf32, #tpu.memory_space<vmem>>, %arg1: memref<224x128xf32, #tpu.memory_space<vmem>>, %arg2: memref<2x128xf32, #tpu.memory_space<vmem>>) attributes {dimension_semantics = [], scalar_prefetch = 0 : i64, scratch_operands = 0 : i64, tpu.core_type = #tpu.core_type<tc>} {
    %c24 = arith.constant 24 : index
    %c0 = arith.constant 0 : index
    %0 = vector.load %arg1[%c24, %c0] : memref<224x128xf32, #tpu.memory_space<vmem>>, vector<8x128xf32>
    %c0_0 = arith.constant 0 : index
    %c0_1 = arith.constant 0 : index
    %1 = vector.load %arg1[%c0_0, %c0_1] : memref<224x128xf32, #tpu.memory_space<vmem>>, vector<24x96xf32>
    %c0_2 = arith.constant 0 : index
    %c0_3 = arith.constant 0 : index
    %2 = vector.load %arg0[%c0_2, %c0_3] : memref<2x24xf32, #tpu.memory_space<vmem>>, vector<2x24xf32>
    %3 = arith.truncf %2 : vector<2x24xf32> to vector<2x24xbf16>
    %4 = arith.truncf %1 : vector<24x96xf32> to vector<24x96xbf16>
    %cst = arith.constant dense<0.000000e+00> : vector<2x96xf32>
    %5 = tpu.matmul %3, %4, %cst {dimension_numbers = #tpu.dot_dimension_numbers<[1], [0], [0], [1], [0, 0, 1, 1], [], []>} : vector<2x24xbf16>, vector<24x96xbf16>, vector<2x96xf32> -> vector<2x96xf32>
    %6 = vector.extract_strided_slice %0 {offsets = [0, 0], sizes = [1, 96], strides = [1, 1]} : vector<8x128xf32> to vector<1x96xf32>
    %7 = vector.broadcast %6 : vector<1x96xf32> to vector<2x96xf32>
    %8 = arith.addf %5, %7 : vector<2x96xf32>
    %9 = vector.extract_strided_slice %8 {offsets = [0, 0], sizes = [2, 32], strides = [1, 1]} : vector<2x96xf32> to vector<2x32xf32>
    %c32 = arith.constant 32 : index
    %c0_4 = arith.constant 0 : index
    %10 = vector.load %arg1[%c32, %c0_4] : memref<224x128xf32, #tpu.memory_space<vmem>>, vector<32x32xf32>
    %11 = arith.truncf %9 : vector<2x32xf32> to vector<2x32xbf16>
    %12 = arith.truncf %10 : vector<32x32xf32> to vector<32x32xbf16>
    %cst_5 = arith.constant dense<0.000000e+00> : vector<2x32xf32>
    %13 = tpu.matmul %11, %12, %cst_5 {dimension_numbers = #tpu.dot_dimension_numbers<[1], [0], [0], [1], [0, 0, 1, 1], [], []>} : vector<2x32xbf16>, vector<32x32xbf16>, vector<2x32xf32> -> vector<2x32xf32>
    %14 = vector.extract_strided_slice %0 {offsets = [1, 0], sizes = [1, 32], strides = [1, 1]} : vector<8x128xf32> to vector<1x32xf32>
    %15 = vector.broadcast %14 : vector<1x32xf32> to vector<2x32xf32>
    %16 = arith.addf %13, %15 : vector<2x32xf32>
    %cst_6 = arith.constant 0.000000e+00 : f32
    %17 = vector.broadcast %cst_6 : f32 to vector<2x32xf32>
    %18 = arith.maximumf %16, %17 : vector<2x32xf32>
    %c96 = arith.constant 96 : index
    %c0_7 = arith.constant 0 : index
    %19 = vector.load %arg1[%c96, %c0_7] : memref<224x128xf32, #tpu.memory_space<vmem>>, vector<32x32xf32>
    %20 = arith.truncf %18 : vector<2x32xf32> to vector<2x32xbf16>
    %21 = arith.truncf %19 : vector<32x32xf32> to vector<32x32xbf16>
    %cst_8 = arith.constant dense<0.000000e+00> : vector<2x32xf32>
    %22 = tpu.matmul %20, %21, %cst_8 {dimension_numbers = #tpu.dot_dimension_numbers<[1], [0], [0], [1], [0, 0, 1, 1], [], []>} : vector<2x32xbf16>, vector<32x32xbf16>, vector<2x32xf32> -> vector<2x32xf32>
    %23 = vector.extract_strided_slice %0 {offsets = [3, 0], sizes = [1, 32], strides = [1, 1]} : vector<8x128xf32> to vector<1x32xf32>
    %24 = vector.broadcast %23 : vector<1x32xf32> to vector<2x32xf32>
    %25 = arith.addf %22, %24 : vector<2x32xf32>
    %cst_9 = arith.constant 0.000000e+00 : f32
    %26 = vector.broadcast %cst_9 : f32 to vector<2x32xf32>
    %27 = arith.maximumf %25, %26 : vector<2x32xf32>
    %28 = vector.extract_strided_slice %8 {offsets = [0, 32], sizes = [2, 32], strides = [1, 1]} : vector<2x96xf32> to vector<2x32xf32>
    %29 = arith.addf %27, %28 : vector<2x32xf32>
    %c64 = arith.constant 64 : index
    %c0_10 = arith.constant 0 : index
    %30 = vector.load %arg1[%c64, %c0_10] : memref<224x128xf32, #tpu.memory_space<vmem>>, vector<32x32xf32>
    %31 = arith.truncf %29 : vector<2x32xf32> to vector<2x32xbf16>
    %32 = arith.truncf %30 : vector<32x32xf32> to vector<32x32xbf16>
    %cst_11 = arith.constant dense<0.000000e+00> : vector<2x32xf32>
    %33 = tpu.matmul %31, %32, %cst_11 {dimension_numbers = #tpu.dot_dimension_numbers<[1], [0], [0], [1], [0, 0, 1, 1], [], []>} : vector<2x32xbf16>, vector<32x32xbf16>, vector<2x32xf32> -> vector<2x32xf32>
    %34 = vector.extract_strided_slice %0 {offsets = [2, 0], sizes = [1, 32], strides = [1, 1]} : vector<8x128xf32> to vector<1x32xf32>
    %35 = vector.broadcast %34 : vector<1x32xf32> to vector<2x32xf32>
    %36 = arith.addf %33, %35 : vector<2x32xf32>
    %cst_12 = arith.constant 0.000000e+00 : f32
    %37 = vector.broadcast %cst_12 : f32 to vector<2x32xf32>
    %38 = arith.maximumf %36, %37 : vector<2x32xf32>
    %c128 = arith.constant 128 : index
    %c0_13 = arith.constant 0 : index
    %39 = vector.load %arg1[%c128, %c0_13] : memref<224x128xf32, #tpu.memory_space<vmem>>, vector<32x32xf32>
    %40 = arith.truncf %38 : vector<2x32xf32> to vector<2x32xbf16>
    %41 = arith.truncf %39 : vector<32x32xf32> to vector<32x32xbf16>
    %cst_14 = arith.constant dense<0.000000e+00> : vector<2x32xf32>
    %42 = tpu.matmul %40, %41, %cst_14 {dimension_numbers = #tpu.dot_dimension_numbers<[1], [0], [0], [1], [0, 0, 1, 1], [], []>} : vector<2x32xbf16>, vector<32x32xbf16>, vector<2x32xf32> -> vector<2x32xf32>
    %43 = vector.extract_strided_slice %0 {offsets = [4, 0], sizes = [1, 32], strides = [1, 1]} : vector<8x128xf32> to vector<1x32xf32>
    %44 = vector.broadcast %43 : vector<1x32xf32> to vector<2x32xf32>
    %45 = arith.addf %42, %44 : vector<2x32xf32>
    %cst_15 = arith.constant 0.000000e+00 : f32
    %46 = vector.broadcast %cst_15 : f32 to vector<2x32xf32>
    %47 = arith.maximumf %45, %46 : vector<2x32xf32>
    %48 = vector.extract_strided_slice %8 {offsets = [0, 64], sizes = [2, 32], strides = [1, 1]} : vector<2x96xf32> to vector<2x32xf32>
    %49 = arith.addf %47, %48 : vector<2x32xf32>
    %c160 = arith.constant 160 : index
    %c0_16 = arith.constant 0 : index
    %50 = vector.load %arg1[%c160, %c0_16] : memref<224x128xf32, #tpu.memory_space<vmem>>, vector<32x32xf32>
    %51 = arith.truncf %49 : vector<2x32xf32> to vector<2x32xbf16>
    %52 = arith.truncf %50 : vector<32x32xf32> to vector<32x32xbf16>
    %cst_17 = arith.constant dense<0.000000e+00> : vector<2x32xf32>
    %53 = tpu.matmul %51, %52, %cst_17 {dimension_numbers = #tpu.dot_dimension_numbers<[1], [0], [0], [1], [0, 0, 1, 1], [], []>} : vector<2x32xbf16>, vector<32x32xbf16>, vector<2x32xf32> -> vector<2x32xf32>
    %54 = vector.extract_strided_slice %0 {offsets = [5, 0], sizes = [1, 32], strides = [1, 1]} : vector<8x128xf32> to vector<1x32xf32>
    %55 = vector.broadcast %54 : vector<1x32xf32> to vector<2x32xf32>
    %56 = arith.addf %53, %55 : vector<2x32xf32>
    %cst_18 = arith.constant 0.000000e+00 : f32
    %57 = vector.broadcast %cst_18 : f32 to vector<2x32xf32>
    %58 = arith.maximumf %56, %57 : vector<2x32xf32>
    %c192 = arith.constant 192 : index
    %c0_19 = arith.constant 0 : index
    %59 = vector.load %arg1[%c192, %c0_19] : memref<224x128xf32, #tpu.memory_space<vmem>>, vector<32x128xf32>
    %60 = arith.truncf %58 : vector<2x32xf32> to vector<2x32xbf16>
    %61 = arith.truncf %59 : vector<32x128xf32> to vector<32x128xbf16>
    %cst_20 = arith.constant dense<0.000000e+00> : vector<2x128xf32>
    %62 = tpu.matmul %60, %61, %cst_20 {dimension_numbers = #tpu.dot_dimension_numbers<[1], [0], [0], [1], [0, 0, 1, 1], [], []>} : vector<2x32xbf16>, vector<32x128xbf16>, vector<2x128xf32> -> vector<2x128xf32>
    %63 = vector.extract_strided_slice %0 {offsets = [6, 0], sizes = [1, 128], strides = [1, 1]} : vector<8x128xf32> to vector<1x128xf32>
    %64 = vector.broadcast %63 : vector<1x128xf32> to vector<2x128xf32>
    %65 = arith.addf %62, %64 : vector<2x128xf32>
    %66 = arith.negf %65 : vector<2x128xf32>
    %67 = math.exp %66 : vector<2x128xf32>
    %cst_21 = arith.constant 1.000000e+00 : f32
    %68 = vector.broadcast %cst_21 : f32 to vector<2x128xf32>
    %69 = arith.addf %68, %67 : vector<2x128xf32>
    %70 = arith.divf %68, %69 : vector<2x128xf32>
    %c0_22 = arith.constant 0 : index
    %c0_23 = arith.constant 0 : index
    %71 = vector.load %arg2[%c0_22, %c0_23] : memref<2x128xf32, #tpu.memory_space<vmem>>, vector<2x128xf32>
    tpu.vector_store %arg2[%c0_22, %c0_23], %70 {strides = array<i32>} : memref<2x128xf32, #tpu.memory_space<vmem>>, vector<2x128xf32>,
    return
  }
}

</mosaic_0001>

<llo_original>
// kernel: fwd.1
$region0: #{fwd.1}
  #allocation0 [shape = 'u32[]', space=smem, size = 0x4, offset = 0x4, fixed_abs, tag = 'smem constant byte address 0x4 - core index']
  #allocation1 [shape = 'u32[72,128]{1,0:T(1,128)}', space=vmem, size = 0x9000, scoped, tag = 'internal scratch']
  %s0 = inlined_call_operand.vmem [shape: f32[2,24], index: 0, kind: input, shape index: {}]
  %s1 = inlined_call_operand.hbm [shape: f32[224,128], index: 1, kind: input, shape index: {}]
  %s2 = inlined_call_operand.hbm [shape: f32[2,128], index: 2, kind: output, shape index: {}]
  %s3 = sld [smem:[#allocation0]]
  $region22: #{fwd.1} parent=0
    _
  %s5 = ssub.s32 1, %s3
  %s6 = scalar_select 0, %s5, %s3
  $region1: #{fwd.1} parent=0
    #allocation2 [shape = 'u8[114688]{0}', space=vmem, size = 0x1c000, scoped, tag = 'input window, operand 1, single buffered']
    #allocation3 [shape = 's32[1]{0}', space=sflag, size = 0x4, scoped, tag = 'scoped memory for fwd.1']
    #allocation4 [shape = 's32[1]{0}', space=sflag, size = 0x4, scoped, tag = 'scoped memory for fwd.1']
    #allocation5 [shape = 'u8[1024]{0}', space=vmem, size = 0x400, scoped, tag = 'output window, operand 0, single buffered']
    %7 = vsyncpa [#allocation3], 0
    %8 = vsyncpa [#allocation4], 0
    // Predicated region
    $region2: #{fwd.1} parent=1 // pred_check
      _
    $region3: #{fwd.1} parent=1 // pred_check_branch
      %10 = sbr.rel (0) target = $region5
    $region4: #{fwd.1} parent=1 // pred_region
      _
    $region5: #{fwd.1} parent=1 // pred_fallthru
      _
    // Predicated region
    $region6: #{fwd.1} parent=1 // pred_check
      _
    $region7: #{fwd.1} parent=1 // pred_check_branch
      %12 = sbr.rel (0) target = $region9
    $region8: #{fwd.1} parent=1 // pred_region
      %14 = vsyncadd [#allocation3], 0
      %s15 = sshll.u32 %s1, 4
      %s16 = int_to_ptr.hbm [resolvable:$true] %s15
      %s17 = sshll.u32 [#allocation2], 4
      %s18 = int_to_ptr.vmem [resolvable:$true] %s17
      %23 = dma.hbm_to_vmem [thread:$0]  %s16, 3584, %s18, [#allocation3], 128, 128, 8
    $region9: #{fwd.1} parent=1 // pred_fallthru
      _
    // Predicated region
    $region10: #{fwd.1} parent=1 // pred_check
      _
    $region11: #{fwd.1} parent=1 // pred_check_branch
      %25 = sbr.rel (0) target = $region13
    $region12: #{fwd.1} parent=1 // pred_region
      %27 = dma.done [#allocation3], 3584
    $region13: #{fwd.1} parent=1 // pred_fallthru
      _
    %v29 = vld [vmem:[#allocation2 + $0x18] sm:$0xff]
    %v30 = vld [vmem:[#allocation2] sm:$0xff]
    %v31 = vld [vmem:[#allocation2 + $0x8] sm:$0xff]
    %v32 = vld [vmem:[#allocation2 + $0x10] sm:$0xff]
    %v33 = vld [vmem:[%s0] sm:$0x3]
    %v34 = vpack.c.bf16 %v33, %v33
    %v35 = vpack.c.bf16 %v31, %v30
    %v36 = vpack.c.bf16 %v32, %v32
    %v37 = vperm.slane %v29, 0
    %vm38 = vcmask 195584
    %v40 = vsel %vm38, %v34, 0
    %vm42 = vcmask 1043456
    %v44 = vsel %vm42, %v36, 0
    %46 = vmatpush.bf16.msra.mxu0 0
    %47 = vmatpush.bf16.msra.mxu0 0
    %48 = vmatpush.bf16.msra.mxu0 0
    %49 = vmatpush.bf16.msra.mxu0 0
    %50 = vmatpush.bf16.msra.mxu0 0
    %51 = vmatpush.bf16.msra.mxu0 0
    %52 = vmatpush.bf16.msra.mxu0 %v44
    %53 = vmatpush.bf16.msra.mxu0 %v35
    %54 = vmatmul.bf16.gmra.mxu0 %v40
    %v55 = vpop.f32.mrf.mxu0
    %v56 = vadd.f32 %v37, %v55
    %v57 = vpop.f32.mrf.mxu0
    %58 = vdwg.mxu0
    %v59 = vld [vmem:[#allocation2 + $0x20] sm:$0xff]
    %v60 = vld [vmem:[#allocation2 + $0x28] sm:$0xff]
    %v61 = vld [vmem:[#allocation2 + $0x30] sm:$0xff]
    %v62 = vld [vmem:[#allocation2 + $0x38] sm:$0xff]
    %v63 = vpack.c.bf16 %v56, %v56
    %v64 = vpack.c.bf16 %v60, %v59
    %v65 = vpack.c.bf16 %v62, %v61
    %v66 = vperm.slane %v29, 1
    %vm67 = vcmask 261120
    %v69 = vsel %vm67, %v63, 0
    %71 = vmatpush.bf16.msra.mxu0 0
    %72 = vmatpush.bf16.msra.mxu0 0
    %73 = vmatpush.bf16.msra.mxu0 0
    %74 = vmatpush.bf16.msra.mxu0 0
    %75 = vmatpush.bf16.msra.mxu0 0
    %76 = vmatpush.bf16.msra.mxu0 0
    %77 = vmatpush.bf16.msra.mxu0 %v65
    %78 = vmatpush.bf16.msra.mxu0 %v64
    %79 = vmatmul.bf16.gmra.mxu0 %v69
    %v80 = vpop.f32.mrf.mxu0
    %v81 = vadd.f32 %v66, %v80
    %v82 = vpop.f32.mrf.mxu0
    %83 = vdwg.mxu0
    %v84 = vmax.f32 %v81, 0.0
    %v85 = vld [vmem:[#allocation2 + $0x60] sm:$0xff]
    %v86 = vld [vmem:[#allocation2 + $0x68] sm:$0xff]
    %v87 = vld [vmem:[#allocation2 + $0x70] sm:$0xff]
    %v88 = vld [vmem:[#allocation2 + $0x78] sm:$0xff]
    %v89 = vpack.c.bf16 %v84, %v84
    %v90 = vpack.c.bf16 %v86, %v85
    %v91 = vpack.c.bf16 %v88, %v87
    %v92 = vperm.slane %v29, 3
    %v94 = vsel %vm67, %v89, 0
    %96 = vmatpush.bf16.msra.mxu0 0
    %97 = vmatpush.bf16.msra.mxu0 0
    %98 = vmatpush.bf16.msra.mxu0 0
    %99 = vmatpush.bf16.msra.mxu0 0
    %100 = vmatpush.bf16.msra.mxu0 0
    %101 = vmatpush.bf16.msra.mxu0 0
    %102 = vmatpush.bf16.msra.mxu0 %v91
    %103 = vmatpush.bf16.msra.mxu0 %v90
    %104 = vmatmul.bf16.gmra.mxu0 %v94
    %v105 = vpop.f32.mrf.mxu0
    %v106 = vadd.f32 %v92, %v105
    %v107 = vpop.f32.mrf.mxu0
    %108 = vdwg.mxu0
    %v109 = vmax.f32 %v106, 0.0
    %111 = vrot.lane.b32.xlu0 %v56, 96
    %v112 = vpop.permute.xlu0 %111
    %v114 = vadd.f32 %v109, %v112
    %v115 = vld [vmem:[#allocation2 + $0x40] sm:$0xff]
    %v116 = vld [vmem:[#allocation2 + $0x48] sm:$0xff]
    %v117 = vld [vmem:[#allocation2 + $0x50] sm:$0xff]
    %v118 = vld [vmem:[#allocation2 + $0x58] sm:$0xff]
    %v119 = vpack.c.bf16 %v114, %v114
    %v120 = vpack.c.bf16 %v116, %v115
    %v121 = vpack.c.bf16 %v118, %v117
    %v122 = vperm.slane %v29, 2
    %v124 = vsel %vm67, %v119, 0
    %126 = vmatpush.bf16.msra.mxu0 0
    %127 = vmatpush.bf16.msra.mxu0 0
    %128 = vmatpush.bf16.msra.mxu0 0
    %129 = vmatpush.bf16.msra.mxu0 0
    %130 = vmatpush.bf16.msra.mxu0 0
    %131 = vmatpush.bf16.msra.mxu0 0
    %132 = vmatpush.bf16.msra.mxu0 %v121
    %133 = vmatpush.bf16.msra.mxu0 %v120
    %134 = vmatmul.bf16.gmra.mxu0 %v124
    %v135 = vpop.f32.mrf.mxu0
    %v136 = vadd.f32 %v122, %v135
    %v137 = vpop.f32.mrf.mxu0
    %138 = vdwg.mxu0
    %v139 = vmax.f32 %v136, 0.0
    %v140 = vld [vmem:[#allocation2 + $0x80] sm:$0xff]
    %v141 = vld [vmem:[#allocation2 + $0x88] sm:$0xff]
    %v142 = vld [vmem:[#allocation2 + $0x90] sm:$0xff]
    %v143 = vld [vmem:[#allocation2 + $0x98] sm:$0xff]
    %v144 = vpack.c.bf16 %v139, %v139
    %v145 = vpack.c.bf16 %v141, %v140
    %v146 = vpack.c.bf16 %v143, %v142
    %v147 = vperm.slane %v29, 4
    %v149 = vsel %vm67, %v144, 0
    %151 = vmatpush.bf16.msra.mxu0 0
    %152 = vmatpush.bf16.msra.mxu0 0
    %153 = vmatpush.bf16.msra.mxu0 0
    %154 = vmatpush.bf16.msra.mxu0 0
    %155 = vmatpush.bf16.msra.mxu0 0
    %156 = vmatpush.bf16.msra.mxu0 0
    %157 = vmatpush.bf16.msra.mxu0 %v146
    %158 = vmatpush.bf16.msra.mxu0 %v145
    %159 = vmatmul.bf16.gmra.mxu0 %v149
    %v160 = vpop.f32.mrf.mxu0
    %v161 = vadd.f32 %v147, %v160
    %v162 = vpop.f32.mrf.mxu0
    %163 = vdwg.mxu0
    %v164 = vmax.f32 %v161, 0.0
    %165 = vrot.lane.b32.xlu0 %v56, 64
    %v166 = vpop.permute.xlu0 %165
    %v168 = vadd.f32 %v164, %v166
    %v169 = vld [vmem:[#allocation2 + $0xa0] sm:$0xff]
    %v170 = vld [vmem:[#allocation2 + $0xa8] sm:$0xff]
    %v171 = vld [vmem:[#allocation2 + $0xb0] sm:$0xff]
    %v172 = vld [vmem:[#allocation2 + $0xb8] sm:$0xff]
    %v173 = vpack.c.bf16 %v168, %v168
    %v174 = vpack.c.bf16 %v170, %v169
    %v175 = vpack.c.bf16 %v172, %v171
    %v176 = vperm.slane %v29, 5
    %v178 = vsel %vm67, %v173, 0
    %180 = vmatpush.bf16.msra.mxu0 0
    %181 = vmatpush.bf16.msra.mxu0 0
    %182 = vmatpush.bf16.msra.mxu0 0
    %183 = vmatpush.bf16.msra.mxu0 0
    %184 = vmatpush.bf16.msra.mxu0 0
    %185 = vmatpush.bf16.msra.mxu0 0
    %186 = vmatpush.bf16.msra.mxu0 %v175
    %187 = vmatpush.bf16.msra.mxu0 %v174
    %188 = vmatmul.bf16.gmra.mxu0 %v178
    %v189 = vpop.f32.mrf.mxu0
    %v190 = vadd.f32 %v176, %v189
    %v191 = vpop.f32.mrf.mxu0
    %192 = vdwg.mxu0
    %v193 = vmax.f32 %v190, 0.0
    %v194 = vld [vmem:[#allocation2 + $0xc0] sm:$0xff]
    %v195 = vld [vmem:[#allocation2 + $0xc8] sm:$0xff]
    %v196 = vld [vmem:[#allocation2 + $0xd0] sm:$0xff]
    %v197 = vld [vmem:[#allocation2 + $0xd8] sm:$0xff]
    %v198 = vpack.c.bf16 %v193, %v193
    %v199 = vpack.c.bf16 %v195, %v194
    %v200 = vpack.c.bf16 %v197, %v196
    %v201 = vperm.slane %v29, 6
    %v203 = vsel %vm67, %v198, 0
    %205 = vmatpush.bf16.msra.mxu0 0
    %206 = vmatpush.bf16.msra.mxu0 0
    %207 = vmatpush.bf16.msra.mxu0 0
    %208 = vmatpush.bf16.msra.mxu0 0
    %209 = vmatpush.bf16.msra.mxu0 0
    %210 = vmatpush.bf16.msra.mxu0 0
    %211 = vmatpush.bf16.msra.mxu0 %v200
    %212 = vmatpush.bf16.msra.mxu0 %v199
    %213 = vmatmul.bf16.gmra.mxu0 %v203
    %v214 = vpop.f32.mrf.mxu0
    %v215 = vadd.f32 %v201, %v214
    %v216 = vpop.f32.mrf.mxu0
    %217 = vdwg.mxu0
    %v218 = vxor.u32 %v215, 2147483648
    %v219 = vmul.f32 %v218, 1.442695
    %v220 = vpow.pop %v219
    %v221 = vadd.f32 %v220, 1.0
    %v222 = vrcp.pop %v221
    %v223 = vmul.f32 %v221, %v222
    %v224 = vsub.f32 1.0, %v223
    %v225 = vmul.f32 %v222, %v224
    %v226 = vadd.f32 %v222, %v225
    %vm227 = vweird.f32 %v221
    %vm228 = vweird.f32 %v222
    %vm229 = vmor %vm227, %vm228
    %v230 = vsel %vm229, %v222, %v226
    %v231 = vand.u32 2147483647, %v221
    %vm232 = vcmp.eq.f32.partialorder %v231, 8.507059e+37
    %v233 = vand.u32 %v221, 2147483648
    %v234 = vor.u32 1.1754944e-38, %v233
    %v235 = vsel %vm232, %v234, %v230
    %v236 = vmul.f32 1.0, %v235
    %237 = vst [vmem:[#allocation5] sm:$0x3] %v236
    // Predicated region
    $region14: #{fwd.1} parent=1 // pred_check
      _
    $region15: #{fwd.1} parent=1 // pred_check_branch
      %239 = sbr.rel (0) target = $region17
    $region16: #{fwd.1} parent=1 // pred_region
      %241 = vsyncadd [#allocation4], 0
      %s243 = sshll.u32 [#allocation5], 4
      %s244 = int_to_ptr.vmem [resolvable:$true] %s243
      %s245 = sshll.u32 %s2, 4
      %s246 = int_to_ptr.hbm [resolvable:$true] %s245
      %248 = dma.vmem_to_hbm [thread:$0]  %s244, 32, %s246, [#allocation4]
    $region17: #{fwd.1} parent=1 // pred_fallthru
      _
    // Predicated region
    $region18: #{fwd.1} parent=1 // pred_check
      _
    $region19: #{fwd.1} parent=1 // pred_check_branch
      %250 = sbr.rel (0) target = $region21
    $region20: #{fwd.1} parent=1 // pred_region
      %252 = dma.done [#allocation4], 32
    $region21: #{fwd.1} parent=1 // pred_fallthru
      _
    %253 = vsyncpa [#allocation3], 1
    %254 = vsyncpa [#allocation4], 1

</llo_original>
